<compile_context>
chip_gen: v6e
topology: v6e:2x2x1
jax: 0.10.0
libtpu: 0.0.40
codegen_flags: <defaults>
</compile_context>

<pallas_src>
import functools

import jax
import jax.numpy as jnp
import numpy as np
from jax import lax
from jax.experimental import pallas as pl
from jax.experimental.pallas import tpu as pltpu


def _round_up(x, m):
    return (x + m - 1) // m * m


def _vmem_capacity_bytes():
    """Per-core VMEM capacity; conservative (v7x-sized) fallback."""
    try:
        cap = getattr(pltpu.get_tpu_info(), "vmem_capacity_bytes", None)
        if cap:
            return int(cap)
    except Exception:
        pass
    return 64 * 1024 * 1024


def _largest_lane_tile(Sp, fits):
    """Largest multiple of 128 that divides Sp and satisfies `fits` (>=128)."""
    best, t = 128, 128
    while t <= Sp:
        if Sp % t == 0 and fits(t):
            best = t
        t += 128
    return best


def _const_spec(shape, index_map):
    """BlockSpec for a grid-invariant operand; single-buffered when supported."""
    try:
        return pl.BlockSpec(shape, index_map, pipeline_mode=pl.Buffered(1))
    except Exception:  # older jax without pipeline_mode / Buffered
        return pl.BlockSpec(shape, index_map)


# ---------------------------------------------------------------------------
# Kernel 1: per-batch start/end projection (+ReLU), ones column folded into
# the weights; also emits the transposed copy consumed by the y side.
# ---------------------------------------------------------------------------
def _proj_kernel(x_ref, w_ref, b_ref, se_ref, set_ref):
    """x_ref: (1, Tp, D); w_ref: (D, 2*Jp); b_ref: (1, 2*Jp) f32;
    se_ref: (1, Tp, 2*Jp) rows [s1|e1]; set_ref: (1, 2*Jp, Tp) transposed."""
    se = jnp.maximum(
        jnp.dot(x_ref[0], w_ref[...], preferred_element_type=jnp.float32)
        + b_ref[...], 0.0)                                   # (Tp, 2*Jp) f32
    se_ref[0] = se.astype(se_ref.dtype)
    set_ref[0] = se.T.astype(set_ref.dtype)


# ---------------------------------------------------------------------------
# Kernel 2: biaffine scores on an (x-tile, y-tile) grid.  Off-diagonal tiles
# compute only the half (fwd or bwd) that is kept; diagonal tiles do both and
# select with the y>=x mask.  Ms/Me (x-tile contracted against U) are cached
# in VMEM scratch across the innermost y axis.
# ---------------------------------------------------------------------------
def _biaffine_tile_kernel(se_ref, set_ref, u_ref, out_ref, ms_ref, me_ref, *,
                          out_size, j_pad, tile):
    """se_ref : (1, T, 2*Jp)   rows [s1|e1] of this x tile
    set_ref: (1, 2*Jp, T)   transposed [s1|e1] columns of this y tile
    u_ref  : (Jp, O*Jp)     zero-padded U reshaped (constant, single buffered)
    out_ref: (1, O, T, T)
    ms_ref, me_ref : (T, O*Jp) VMEM scratch, refreshed once per x tile."""
    f32 = jnp.float32
    Jp, T = j_pad, tile
    i = pl.program_id(1)          # x-tile (rows)
    j = pl.program_id(2)          # y-tile (cols), innermost / "arbitrary"

    @pl.when(j == 0)              # contract this x tile against U once
    def _():
        ms_ref[...] = jnp.dot(se_ref[0, :, :Jp], u_ref[...],
                              preferred_element_type=f32).astype(ms_ref.dtype)
        me_ref[...] = jnp.dot(se_ref[0, :, Jp:], u_ref[...],
                              preferred_element_type=f32).astype(me_ref.dtype)

    @pl.when(j > i)               # strictly above the diagonal: fwd only
    def _():
        e1t = set_ref[0, Jp:, :]
        for o in range(out_size):
            out_ref[0, o] = jnp.dot(ms_ref[:, o * Jp:(o + 1) * Jp], e1t,
                                    preferred_element_type=f32
                                    ).astype(out_ref.dtype)

    @pl.when(j < i)               # strictly below the diagonal: bwd only
    def _():
        s1t = set_ref[0, :Jp, :]
        for o in range(out_size):
            out_ref[0, o] = jnp.dot(me_ref[:, o * Jp:(o + 1) * Jp], s1t,
                                    preferred_element_type=f32
                                    ).astype(out_ref.dtype)

    @pl.when(j == i)              # diagonal tile: mix with the y>=x mask
    def _():
        s1t = set_ref[0, :Jp, :]
        e1t = set_ref[0, Jp:, :]
        ix = lax.broadcasted_iota(jnp.int32, (T, T), 0)
        iy = lax.broadcasted_iota(jnp.int32, (T, T), 1)
        mask_u = iy >= ix
        for o in range(out_size):
            fwd = jnp.dot(ms_ref[:, o * Jp:(o + 1) * Jp], e1t,
                          preferred_element_type=f32)
            bwd = jnp.dot(me_ref[:, o * Jp:(o + 1) * Jp], s1t,
                          preferred_element_type=f32)
            out_ref[0, o] = jnp.where(mask_u, fwd, bwd).astype(out_ref.dtype)


# ---------------------------------------------------------------------------
# Wrapper
# ---------------------------------------------------------------------------
def biaffine_encoder(x, Ws, bs, We, be, U, *, mxu_dtype=jnp.bfloat16,
                     out_dtype=jnp.float32, channels_last=False, tile_cap=None):
    """BiaffineEncoder forward (use_span_encoder=False, dropout = identity).

    x: (B, S, D) float32.
    Returns (B, O, S, S) (kernel-native, fastest) by default, or the PyTorch
    layout (B, S, S, O) when channels_last=True (costs an extra HBM transpose
    of the largest tensor).  mxu_dtype defaults to bfloat16 (f32 accumulation);
    pass jnp.float32 for bit-faithful matmuls.  `tile_cap` optionally caps the
    square S-tile size (testing / tuning knob).
    """
    B, S, D = x.shape
    H = Ws.shape[1]
    J = H + 1
    O = U.shape[1]
    assert U.shape == (J, O, J)
    assert Ws.shape == (D, H) and We.shape == (D, H)
    assert bs.shape == (H,) and be.shape == (H,)

    Jp = _round_up(J, 128)        # lane-aligned bilinear dim
    Sp = _round_up(S, 128)        # lane-dense output stores + robust tiling
    esz = jnp.dtype(mxu_dtype).itemsize
    out_esz = jnp.dtype(out_dtype).itemsize

    # Fold the ones column into the projection: zero weight column + bias 1.0
    # (ReLU(1)=1); padded lanes stay exactly zero (and U is zero there too).
    def _aug(W, b):
        Wp = jnp.zeros((D, Jp), jnp.float32).at[:, :H].set(W.astype(jnp.float32))
        bp = jnp.zeros((Jp,), jnp.float32).at[:H].set(b.astype(jnp.float32))
        return Wp, bp.at[H].set(1.0)

    Wsp, bsp = _aug(Ws, bs)
    Wep, bep = _aug(We, be)
    wcat = jnp.concatenate([Wsp, Wep], axis=1).astype(mxu_dtype)      # (D, 2*Jp)
    bcat = jnp.concatenate([bsp, bep]).reshape(1, 2 * Jp)             # f32
    u_flat = (jnp.zeros((Jp, O, Jp), jnp.float32)
              .at[:J, :, :J].set(U.astype(jnp.float32))
              .reshape(Jp, O * Jp).astype(mxu_dtype))                 # (Jp, O*Jp)

    x_p = jnp.pad(x.astype(mxu_dtype), ((0, 0), (0, Sp - S), (0, 0)))

    # Generation-aware VMEM budget (v7x 64 MiB/core, v5e/v6e 128 MiB).
    vmem_limit = int(0.75 * _vmem_capacity_bytes())
    budget = int(0.85 * vmem_limit)

    # ---- 1) projection: se = ReLU(x @ [Ws|We] + b) and its transpose --------
    def proj_fits(t):
        return (2 * t * D * esz + D * 2 * Jp * esz + 2 * Jp * 4
                + 8 * Jp * t * esz + 3 * t * 2 * Jp * 4) <= budget
    Tp = _largest_lane_tile(Sp, proj_fits)

    se, seT = pl.pallas_call(
        _proj_kernel,
        out_shape=(jax.ShapeDtypeStruct((B, Sp, 2 * Jp), mxu_dtype),
                   jax.ShapeDtypeStruct((B, 2 * Jp, Sp), mxu_dtype)),
        grid_spec=pltpu.PrefetchScalarGridSpec(
            num_scalar_prefetch=0,
            grid=(B, Sp // Tp),
            in_specs=[
                pl.BlockSpec((1, Tp, D), lambda b, s: (b, s, 0)),
                _const_spec((D, 2 * Jp), lambda b, s: (0, 0)),
                _const_spec((1, 2 * Jp), lambda b, s: (0, 0)),
            ],
            out_specs=[
                pl.BlockSpec((1, Tp, 2 * Jp), lambda b, s: (b, s, 0)),
                pl.BlockSpec((1, 2 * Jp, Tp), lambda b, s: (b, 0, s)),
            ]),
        compiler_params=pltpu.CompilerParams(
            dimension_semantics=("parallel", "parallel"),
            vmem_limit_bytes=vmem_limit),
    )(x_p, wcat, bcat)

    # ---- 2) bilinear scores with triangular tile skipping --------------------
    def main_fits(t):
        if tile_cap is not None and t > tile_cap:
            return False
        blocks = (Jp * O * Jp * esz              # u_flat (single buffered)
                  + 2 * t * 2 * Jp * esz         # se x-tile (double buffered)
                  + 2 * 2 * Jp * t * esz         # seT y-tile
                  + 2 * O * t * t * out_esz)     # output tile
        scratch = 2 * t * O * Jp * esz           # Ms / Me cache
        temps = 2 * t * O * Jp * 4 + 6 * t * t * 4
        return blocks + scratch + temps <= budget
    T = _largest_lane_tile(Sp, main_fits)
    n_t = Sp // T

    kernel = functools.partial(_biaffine_tile_kernel, out_size=O, j_pad=Jp,
                               tile=T)
    out_padded = pl.pallas_call(
        kernel,
        out_shape=jax.ShapeDtypeStruct((B, O, Sp, Sp), out_dtype),
        grid_spec=pltpu.PrefetchScalarGridSpec(
            num_scalar_prefetch=0,
            grid=(B, n_t, n_t),
            in_specs=[
                pl.BlockSpec((1, T, 2 * Jp), lambda b, i, j: (b, i, 0)),
                pl.BlockSpec((1, 2 * Jp, T), lambda b, i, j: (b, 0, j)),
                _const_spec((Jp, O * Jp), lambda b, i, j: (0, 0)),
            ],
            out_specs=pl.BlockSpec((1, O, T, T), lambda b, i, j: (b, 0, i, j)),
            scratch_shapes=[pltpu.VMEM((T, O * Jp), mxu_dtype),
                            pltpu.VMEM((T, O * Jp), mxu_dtype)]),
        compiler_params=pltpu.CompilerParams(
            dimension_semantics=("parallel", "parallel", "arbitrary"),
            vmem_limit_bytes=vmem_limit),
    )(se, seT, u_flat)

    out = out_padded if Sp == S else out_padded[:, :, :S, :S]
    if channels_last:
        # PyTorch layout (B, S, S, O): extra HBM round trip of the largest
        # tensor; prefer the native layout + an O-major consumer when possible.
        return jnp.transpose(out, (0, 2, 3, 1))
    return out


# ---------------------------------------------------------------------------
# Pure-JAX reference (PyTorch layout (B, S, S, O))
# ---------------------------------------------------------------------------
def reference(x, Ws, bs, We, be, U):
    hp = lax.Precision.HIGHEST
    s = jax.nn.relu(jnp.einsum('bsd,dh->bsh', x, Ws, precision=hp) + bs)
    e = jax.nn.relu(jnp.einsum('bsd,dh->bsh', x, We, precision=hp) + be)
    ones = jnp.ones(s.shape[:-1] + (1,), s.dtype)
    s1 = jnp.concatenate([s, ones], axis=-1)
    e1 = jnp.concatenate([e, ones], axis=-1)
    fwd = jnp.einsum('bxi,ioj,byj->bxyo', s1, U, e1, precision=hp)
    bwd = jnp.einsum('bxi,ioj,byj->bxyo', e1, U, s1, precision=hp)
    S = x.shape[1]
    yge = (jnp.arange(S)[None, :] >= jnp.arange(S)[:, None])[None, :, :, None]
    return jnp.where(yge, fwd, bwd)


if __name__ == "__main__":
    # Small shapes consistent with the module's forward.
    B, S = 2, 8
    input_size = 32        # D
    biaf_input_size = 16   # H
    output_size = 8        # O
    J = biaf_input_size + 1

    key = jax.random.PRNGKey(0)
    kx, kws, kbs, kwe, kbe, ku, kx2 = jax.random.split(key, 7)

    x = jax.random.normal(kx, (B, S, input_size), jnp.float32)
    Ws = jax.random.normal(kws, (input_size, biaf_input_size), jnp.float32) * 0.1
    bs = jax.random.normal(kbs, (biaf_input_size,), jnp.float32) * 0.1
    We = jax.random.normal(kwe, (input_size, biaf_input_size), jnp.float32) * 0.1
    be = jax.random.normal(kbe, (biaf_input_size,), jnp.float32) * 0.1
    U = jax.random.normal(ku, (J, output_size, J), jnp.float32) * (2.0 / (2 * J)) ** 0.5

    ref = reference(x, Ws, bs, We, be, U)

    # 1) exact f32 MXU path, PyTorch channels-last layout (single diagonal tile).
    out_f32 = jax.block_until_ready(
        biaffine_encoder(x, Ws, bs, We, be, U, mxu_dtype=jnp.float32,
                         channels_last=True))
    np.testing.assert_allclose(np.asarray(out_f32), np.asarray(ref),
                               rtol=1e-4, atol=1e-4)

    # 2) multi-tile f32 path (S=200 -> padded 256, 128-wide tiles) exercising the
    #    above/below/diagonal tile branches; kernel-native (B, O, S, S) layout.
    S2 = 200
    x2 = jax.random.normal(kx2, (B, S2, input_size), jnp.float32)
    out2 = jax.block_until_ready(
        biaffine_encoder(x2, Ws, bs, We, be, U, mxu_dtype=jnp.float32,
                         channels_last=False, tile_cap=128))
    ref2 = jnp.transpose(reference(x2, Ws, bs, We, be, U), (0, 3, 1, 2))
    np.testing.assert_allclose(np.asarray(out2), np.asarray(ref2),
                               rtol=1e-4, atol=1e-4)

    # 3) default bf16 MXU path (loose tolerance vs the f32 reference).
    out_bf16 = jax.block_until_ready(
        biaffine_encoder(x, Ws, bs, We, be, U, channels_last=True))
    np.testing.assert_allclose(np.asarray(out_bf16), np.asarray(ref),
                               rtol=1e-1, atol=1e-1)

    print("KERNEL_OK")
</pallas_src>

<mosaic_0001>
module attributes {stable_mosaic.version = 11 : i64} {
  func.func @_proj_kernel(%arg0: i32, %arg1: i32, %arg2: memref<1x128x32xf32, #tpu.memory_space<vmem>>, %arg3: memref<32x256xf32, #tpu.memory_space<vmem>>, %arg4: memref<1x256xf32, #tpu.memory_space<vmem>>, %arg5: memref<1x128x256xf32, #tpu.memory_space<vmem>>, %arg6: memref<1x256x128xf32, #tpu.memory_space<vmem>>) attributes {dimension_semantics = [#tpu.dimension_semantics<parallel>, #tpu.dimension_semantics<parallel>], iteration_bounds = array<i64: 2, 1>, scalar_prefetch = 0 : i64, scratch_operands = 0 : i64, tpu.core_type = #tpu.core_type<tc>, window_params = [{transform_indices = @transform_0, window_bounds = array<i64: 1, 128, 32>}, {pipeline_mode = #tpu.pipeline_mode<synchronous>, transform_indices = @transform_1, window_bounds = array<i64: 32, 256>}, {pipeline_mode = #tpu.pipeline_mode<synchronous>, transform_indices = @transform_2, window_bounds = array<i64: 1, 256>}, {transform_indices = @transform_3, window_bounds = array<i64: 1, 128, 256>}, {transform_indices = @transform_4, window_bounds = array<i64: 1, 256, 128>}]} {
    %c0 = arith.constant 0 : index
    %c0_0 = arith.constant 0 : index
    %c0_1 = arith.constant 0 : index
    %0 = vector.load %arg2[%c0, %c0_0, %c0_1] : memref<1x128x32xf32, #tpu.memory_space<vmem>>, vector<1x128x32xf32>
    %1 = vector.shape_cast %0 : vector<1x128x32xf32> to vector<128x32xf32>
    %c0_2 = arith.constant 0 : index
    %c0_3 = arith.constant 0 : index
    %2 = vector.load %arg3[%c0_2, %c0_3] : memref<32x256xf32, #tpu.memory_space<vmem>>, vector<32x256xf32>
    %cst = arith.constant dense<0.000000e+00> : vector<128x256xf32>
    %3 = tpu.matmul %1, %2, %cst {dimension_numbers = #tpu.dot_dimension_numbers<[1], [0], [0], [1], [0, 0, 1, 1], [], []>} : vector<128x32xf32>, vector<32x256xf32>, vector<128x256xf32> -> vector<128x256xf32>
    %c0_4 = arith.constant 0 : index
    %c0_5 = arith.constant 0 : index
    %4 = vector.load %arg4[%c0_4, %c0_5] : memref<1x256xf32, #tpu.memory_space<vmem>>, vector<1x256xf32>
    %5 = vector.broadcast %4 : vector<1x256xf32> to vector<128x256xf32>
    %6 = arith.addf %3, %5 : vector<128x256xf32>
    %cst_6 = arith.constant 0.000000e+00 : f32
    %7 = vector.broadcast %cst_6 : f32 to vector<128x256xf32>
    %8 = arith.maximumf %6, %7 : vector<128x256xf32>
    %c0_7 = arith.constant 0 : index
    %c0_8 = arith.constant 0 : index
    %c0_9 = arith.constant 0 : index
    %9 = vector.load %arg5[%c0_7, %c0_8, %c0_9] : memref<1x128x256xf32, #tpu.memory_space<vmem>>, vector<1x128x256xf32>
    %10 = vector.shape_cast %9 : vector<1x128x256xf32> to vector<128x256xf32>
    %11 = vector.shape_cast %8 : vector<128x256xf32> to vector<1x128x256xf32>
    tpu.vector_store %arg5[%c0_7, %c0_8, %c0_9], %11 {strides = array<i32>} : memref<1x128x256xf32, #tpu.memory_space<vmem>>, vector<1x128x256xf32>,
    %12 = tpu.transpose %8, [1, 0] : vector<128x256xf32> -> vector<256x128xf32>
    %c0_10 = arith.constant 0 : index
    %c0_11 = arith.constant 0 : index
    %c0_12 = arith.constant 0 : index
    %13 = vector.load %arg6[%c0_10, %c0_11, %c0_12] : memref<1x256x128xf32, #tpu.memory_space<vmem>>, vector<1x256x128xf32>
    %14 = vector.shape_cast %13 : vector<1x256x128xf32> to vector<256x128xf32>
    %15 = vector.shape_cast %12 : vector<256x128xf32> to vector<1x256x128xf32>
    tpu.vector_store %arg6[%c0_10, %c0_11, %c0_12], %15 {strides = array<i32>} : memref<1x256x128xf32, #tpu.memory_space<vmem>>, vector<1x256x128xf32>,
    return
  }
  func.func @transform_0(%arg0: i32, %arg1: i32) -> (i32, i32, i32) {
    %c0_i32 = arith.constant 0 : i32
    %c0_i32_0 = arith.constant 0 : i32
    return %arg0, %arg1, %c0_i32 : i32, i32, i32
  }
  func.func @transform_1(%arg0: i32, %arg1: i32) -> (i32, i32) {
    %c0_i32 = arith.constant 0 : i32
    %c0_i32_0 = arith.constant 0 : i32
    %c0_i32_1 = arith.constant 0 : i32
    return %c0_i32, %c0_i32_0 : i32, i32
  }
  func.func @transform_2(%arg0: i32, %arg1: i32) -> (i32, i32) {
    %c0_i32 = arith.constant 0 : i32
    %c0_i32_0 = arith.constant 0 : i32
    %c0_i32_1 = arith.constant 0 : i32
    return %c0_i32, %c0_i32_0 : i32, i32
  }
  func.func @transform_3(%arg0: i32, %arg1: i32) -> (i32, i32, i32) {
    %c0_i32 = arith.constant 0 : i32
    %c0_i32_0 = arith.constant 0 : i32
    return %arg0, %arg1, %c0_i32 : i32, i32, i32
  }
  func.func @transform_4(%arg0: i32, %arg1: i32) -> (i32, i32, i32) {
    %c0_i32 = arith.constant 0 : i32
    %c0_i32_0 = arith.constant 0 : i32
    return %arg0, %c0_i32, %arg1 : i32, i32, i32
  }
}

</mosaic_0001>

<llo_original>
// kernel: tpu_custom_call.1
$region0: #{tpu_custom_call.1}
  #allocation0 [shape = 'u32[]', space=smem, size = 0x4, offset = 0x4, fixed_abs, tag = 'smem constant byte address 0x4 - core index']
  #allocation1 [shape = 'u32[144,128]{1,0:T(1,128)}', space=vmem, size = 0x12000, scoped, tag = 'internal scratch']
  %s0 = inlined_call_operand.vmem [shape: f32[2,128,32], index: 0, kind: input, shape index: {}]
  %s1 = inlined_call_operand.vmem [shape: f32[32,256], index: 1, kind: input, shape index: {}]
  %s2 = inlined_call_operand.vmem [shape: f32[1,256], index: 2, kind: input, shape index: {}]
  %s3 = inlined_call_operand.hbm [shape: f32[2,128,256], index: 3, kind: output, shape index: {0}]
  %s4 = inlined_call_operand.hbm [shape: f32[2,256,128], index: 4, kind: output, shape index: {1}]
  %5 = xla_tuple %s3, %s4
  %s6 = sld [smem:[#allocation0]]
  $region53: #{tpu_custom_call.1} parent=0
    _
  %s8 = ssub.s32 1, %s6
  %s9 = scalar_select 0, %s8, %s6
  $region1: #{tpu_custom_call.1} parent=0
    #allocation2 [shape = 'u8[262144]{0}', space=vmem, size = 0x40000, scoped, tag = 'output window, operand 0']
    #allocation3 [shape = 's32[2]{0}', space=sflag, size = 0x8, scoped, tag = 'scoped memory for tpu_custom_call.1']
    #allocation4 [shape = 'u8[262144]{0}', space=vmem, size = 0x40000, scoped, tag = 'output window, operand 1']
    #allocation5 [shape = 's32[2]{0}', space=sflag, size = 0x8, scoped, tag = 'scoped memory for tpu_custom_call.1']
    %10 = vsyncpa [#allocation3], 0
    %s11 = scalar_lea.sflag [#allocation3], 1
    %12 = vsyncpa %s11, 0
    %13 = vsyncpa [#allocation5], 0
    %s14 = scalar_lea.sflag [#allocation5], 1
    %15 = vsyncpa %s14, 0
    loop: start=0, step=1, limit=4
    $region2: #{tpu_custom_call.1} parent=1 // loop_pre_header
      _
    $region3: #{tpu_custom_call.1} parent=1 // loop_header
      %s17 = sphi 0, %s21
      %p18 = scmp.ge.s32.totalorder %s17, 4
      %s24 = sphi 0, %s36
      %s25 = sphi 0, %s32
      %s26 = sphi 0, %s24
      %s27 = sphi 0, %s25
      %s28 = sphi 0, %s26
      %s29 = sphi 0, %s27
      %s41 = sphi 0, %s43
      %s44 = sphi 0, %s41
      %s45 = sphi 0, %s44
      %s61 = sphi 0, %s45
      %s65 = sphi 0, %s65
      %s67 = sphi 0, %s65
      %s68 = sphi 0, %s67
      %s82 = sphi 0, %s68
      %s86 = sphi 0, %s86
      %s88 = sphi 0, %s86
      %s89 = sphi 0, %s88
      %s103 = sphi 0, %s89
      %s111 = sphi 0, %s113
      %s114 = sphi 0, %s111
      %s115 = sphi 0, %s114
      %s131 = sphi 0, %s115
      %s139 = sphi 0, %s141
      %s142 = sphi 0, %s139
      %s143 = sphi 0, %s142
      %s159 = sphi 0, %s143
    $region4: #{tpu_custom_call.1} parent=1 // loop_header_branch
      %20 = sbr.rel (%p18) target = $region8
    $region5: #{tpu_custom_call.1} parent=1 // loop_body
      %s22 = ssub.s32 %s17, 1
      %s23 = ssub.s32 %s17, 2
      %s30 = sadd.s32 1, %s25
      %p31 = scmp.ge.s32.totalorder %s30, 1
      %s32 = scalar_select %p31, 0, %s30
      %s33 = sadd.s32 1, %s24
      %s34 = scalar_select %p31, %s33, %s24
      %p35 = scmp.ge.s32.totalorder %s34, 2
      %s36 = scalar_select %p35, 0, %s34
      %s37 = ssub.s32 %s24, %s36
      %s38 = ssub.s32 %s25, %s32
      %s39 = sor.u32 %s37, %s38
      %p40 = scmp.eq.s32.totalorder %s39, 0
      %s42 = sadd.s32 %s41, 1
      %s43 = scalar_select %p40, %s41, %s42
      %p46 = pneg %p40
      %p47 = scmp.eq.s32.totalorder %s17, 1
      %p48 = por %p46, %p47
      %p49 = scmp.ne.s32.totalorder %s41, %s44
      %p50 = scmp.eq.s32.totalorder %s17, 0
      %p51 = por %p49, %p50
      %p52 = scmp.ne.s32.totalorder %s41, %s44
      %p53 = scmp.eq.s32.totalorder %s22, 1
      %p54 = por %p52, %p53
      %p55 = scmp.ne.s32.totalorder %s44, %s45
      %p56 = scmp.eq.s32.totalorder %s22, 0
      %p57 = por %p55, %p56
      %p58 = scmp.ne.s32.totalorder %s44, %s45
      %p59 = scmp.eq.s32.totalorder %s23, 1
      %p60 = por %p58, %p59
      %p62 = scmp.ne.s32.totalorder %s45, %s61
      %p63 = scmp.eq.s32.totalorder %s23, 0
      %p64 = por %p62, %p63
      %s66 = sadd.s32 %s65, 1
      %p69 = scmp.eq.s32.totalorder %s17, 1
      %p70 = scmp.ne.s32.totalorder %s65, %s67
      %p71 = scmp.eq.s32.totalorder %s17, 0
      %p72 = por %p70, %p71
      %p73 = scmp.ne.s32.totalorder %s65, %s67
      %p74 = scmp.eq.s32.totalorder %s22, 1
      %p75 = por %p73, %p74
      %p76 = scmp.ne.s32.totalorder %s67, %s68
      %p77 = scmp.eq.s32.totalorder %s22, 0
      %p78 = por %p76, %p77
      %p79 = scmp.ne.s32.totalorder %s67, %s68
      %p80 = scmp.eq.s32.totalorder %s23, 1
      %p81 = por %p79, %p80
      %p83 = scmp.ne.s32.totalorder %s68, %s82
      %p84 = scmp.eq.s32.totalorder %s23, 0
      %p85 = por %p83, %p84
      %s87 = sadd.s32 %s86, 1
      %p90 = scmp.eq.s32.totalorder %s17, 1
      %p91 = scmp.ne.s32.totalorder %s86, %s88
      %p92 = scmp.eq.s32.totalorder %s17, 0
      %p93 = por %p91, %p92
      %p94 = scmp.ne.s32.totalorder %s86, %s88
      %p95 = scmp.eq.s32.totalorder %s22, 1
      %p96 = por %p94, %p95
      %p97 = scmp.ne.s32.totalorder %s88, %s89
      %p98 = scmp.eq.s32.totalorder %s22, 0
      %p99 = por %p97, %p98
      %p100 = scmp.ne.s32.totalorder %s88, %s89
      %p101 = scmp.eq.s32.totalorder %s23, 1
      %p102 = por %p100, %p101
      %p104 = scmp.ne.s32.totalorder %s89, %s103
      %p105 = scmp.eq.s32.totalorder %s23, 0
      %p106 = por %p104, %p105
      %s107 = ssub.s32 %s24, %s36
      %s108 = ssub.s32 %s25, %s32
      %s109 = sor.u32 %s107, %s108
      %p110 = scmp.eq.s32.totalorder %s109, 0
      %s112 = sadd.s32 %s111, 1
      %s113 = scalar_select %p110, %s111, %s112
      %p116 = pneg %p110
      %p117 = scmp.eq.s32.totalorder %s17, 1
      %p118 = por %p116, %p117
      %p119 = scmp.ne.s32.totalorder %s111, %s114
      %p120 = scmp.eq.s32.totalorder %s17, 0
      %p121 = por %p119, %p120
      %p122 = scmp.ne.s32.totalorder %s111, %s114
      %p123 = scmp.eq.s32.totalorder %s22, 1
      %p124 = por %p122, %p123
      %p125 = scmp.ne.s32.totalorder %s114, %s115
      %p126 = scmp.eq.s32.totalorder %s22, 0
      %p127 = por %p125, %p126
      %p128 = scmp.ne.s32.totalorder %s114, %s115
      %p129 = scmp.eq.s32.totalorder %s23, 1
      %p130 = por %p128, %p129
      %p132 = scmp.ne.s32.totalorder %s115, %s131
      %p133 = scmp.eq.s32.totalorder %s23, 0
      %p134 = por %p132, %p133
      %s135 = ssub.s32 %s24, %s36
      %s136 = ssub.s32 %s25, %s32
      %s137 = sor.u32 %s135, %s136
      %p138 = scmp.eq.s32.totalorder %s137, 0
      %s140 = sadd.s32 %s139, 1
      %s141 = scalar_select %p138, %s139, %s140
      %p144 = pneg %p138
      %p145 = scmp.eq.s32.totalorder %s17, 1
      %p146 = por %p144, %p145
      %p147 = scmp.ne.s32.totalorder %s139, %s142
      %p148 = scmp.eq.s32.totalorder %s17, 0
      %p149 = por %p147, %p148
      %p150 = scmp.ne.s32.totalorder %s139, %s142
      %p151 = scmp.eq.s32.totalorder %s22, 1
      %p152 = por %p150, %p151
      %p153 = scmp.ne.s32.totalorder %s142, %s143
      %p154 = scmp.eq.s32.totalorder %s22, 0
      %p155 = por %p153, %p154
      %p156 = scmp.ne.s32.totalorder %s142, %s143
      %p157 = scmp.eq.s32.totalorder %s23, 1
      %p158 = por %p156, %p157
      %p160 = scmp.ne.s32.totalorder %s143, %s159
      %p161 = scmp.eq.s32.totalorder %s23, 0
      %p162 = por %p160, %p161
      %p163 = scmp.le.s32.totalorder 1, %s17
      %p164 = scmp.lt.s32.totalorder %s17, 3
      %p165 = pnand %p163, %p164
      %p166 = pneg %p165
      // Predicated region
      $region9: #{tpu_custom_call.1} parent=5 // pred_check
        _
      $region10: #{tpu_custom_call.1} parent=5 // pred_check_branch
        %168 = sbr.rel (%p165) target = $region12
      $region11: #{tpu_custom_call.1} parent=5 // pred_region
        %s169 = ssub.s32 %s17, 1
        // Predicated region
        $region13: #{tpu_custom_call.1} parent=11 // pred_check
          %p170 = pneg %p78
        $region14: #{tpu_custom_call.1} parent=11 // pred_check_branch
          %172 = sbr.rel (%p170) target = $region16
        $region15: #{tpu_custom_call.1} parent=11 // pred_region
          _
        $region16: #{tpu_custom_call.1} parent=11 // pred_fallthru
          _
        // Predicated region
        $region17: #{tpu_custom_call.1} parent=11 // pred_check
          %p173 = pneg %p99
        $region18: #{tpu_custom_call.1} parent=11 // pred_check_branch
          %175 = sbr.rel (%p173) target = $region20
        $region19: #{tpu_custom_call.1} parent=11 // pred_region
          _
        $region20: #{tpu_custom_call.1} parent=11 // pred_fallthru
          _
      $region12: #{tpu_custom_call.1} parent=5 // pred_fallthru
        _
      %p176 = scmp.lt.s32.totalorder %s17, 2
      // Predicated region
      $region21: #{tpu_custom_call.1} parent=5 // pred_check
        %p177 = pneg %p176
      $region22: #{tpu_custom_call.1} parent=5 // pred_check_branch
        %179 = sbr.rel (%p177) target = $region24
      $region23: #{tpu_custom_call.1} parent=5 // pred_region
        // Predicated region
        $region25: #{tpu_custom_call.1} parent=23 // pred_check
          %p180 = pneg %p51
        $region26: #{tpu_custom_call.1} parent=23 // pred_check_branch
          %182 = sbr.rel (%p180) target = $region28
        $region27: #{tpu_custom_call.1} parent=23 // pred_region
          %s183 = smul.u32 16, %s25
          %p184 = scmp.lt.s32.totalorder %s24, 1
          %s185 = scalar_select %p184, %s24, 1
          %p186 = scmp.lt.s32.totalorder %s183, 15
          %s187 = scalar_select %p186, %s183, 15
          %s188 = smul.addr %s185, 16
          %s189 = sadd.s32 %s187, %s188
          %s190 = smul.addr %s189, 8
          %s191 = scalar_lea.vmem %s0, %s190
          %s192 = smul.u32 16, %s25
        $region28: #{tpu_custom_call.1} parent=23 // pred_fallthru
          _
      $region24: #{tpu_custom_call.1} parent=5 // pred_fallthru
        _
      %p193 = scmp.le.s32.totalorder 1, %s17
      %p194 = scmp.lt.s32.totalorder %s17, 3
      %p195 = pnand %p193, %p194
      %p196 = pneg %p195
      // Predicated region
      $region29: #{tpu_custom_call.1} parent=5 // pred_check
        _
      $region30: #{tpu_custom_call.1} parent=5 // pred_check_branch
        %198 = sbr.rel (%p195) target = $region32
      $region31: #{tpu_custom_call.1} parent=5 // pred_region
        %s199 = ssub.s32 %s17, 1
        %s200 = smul.u32 16, %s27
        %p201 = scmp.lt.s32.totalorder %s26, 1
        %s202 = scalar_select %p201, %s26, 1
        %p203 = scmp.lt.s32.totalorder %s200, 15
        %s204 = scalar_select %p203, %s200, 15
        %s205 = smul.addr %s202, 16
        %s206 = sadd.s32 %s204, %s205
        %s207 = smul.addr %s206, 8
        %s208 = scalar_lea.vmem %s0, %s207
        %p209 = pneg %p57
        %p210 = pneg %p54
        %p211 = pneg %p78
        %p212 = pneg %p75
        %p213 = pneg %p99
        %p214 = pneg %p96
        %p215 = pneg %p127
        %p216 = pneg %p124
        %s217 = sand.u32 %s114, 1
        %s218 = scalar_lea.sflag [#allocation3], %s217
        %s219 = sand.u32 %s114, 1
        %s220 = smul.addr %s219, 256
        %s221 = scalar_lea.vmem [#allocation2], %s220
        %p222 = pneg %p155
        %p223 = pneg %p152
        %s224 = sand.u32 %s142, 1
        %s225 = scalar_lea.sflag [#allocation5], %s224
        %s226 = sand.u32 %s142, 1
        %s227 = smul.addr %s226, 256
        %s228 = scalar_lea.vmem [#allocation4], %s227
        %s229 = smul.u32 16, %s27
        %p230 = scmp.lt.s32.totalorder %s26, 1
        %s231 = scalar_select %p230, %s26, 1
        %p232 = scmp.lt.s32.totalorder %s229, 15
        %s233 = scalar_select %p232, %s229, 15
        %s234 = smul.addr %s231, 16
        %s235 = sadd.s32 %s233, %s234
        %s236 = smul.addr %s235, 8
        %s237 = scalar_lea.vmem %s0, %s236
        %s238 = smul.u32 16, %s27
        %s239 = smul.u32 16, %s27
        %v240 = vld [vmem:[%s237] sm:$0xff]
        %v241 = vld [vmem:[%s237 + $0x8] sm:$0xff]
        %v242 = vld [vmem:[%s237 + $0x10] sm:$0xff]
        %v243 = vld [vmem:[%s237 + $0x18] sm:$0xff]
        %v244 = vld [vmem:[%s237 + $0x20] sm:$0xff]
        %v245 = vld [vmem:[%s237 + $0x28] sm:$0xff]
        %v246 = vld [vmem:[%s237 + $0x30] sm:$0xff]
        %v247 = vld [vmem:[%s237 + $0x38] sm:$0xff]
        %v248 = vld [vmem:[%s237 + $0x40] sm:$0xff]
        %v249 = vld [vmem:[%s237 + $0x48] sm:$0xff]
        %v250 = vld [vmem:[%s237 + $0x50] sm:$0xff]
        %v251 = vld [vmem:[%s237 + $0x58] sm:$0xff]
        %v252 = vld [vmem:[%s237 + $0x60] sm:$0xff]
        %v253 = vld [vmem:[%s237 + $0x68] sm:$0xff]
        %v254 = vld [vmem:[%s237 + $0x70] sm:$0xff]
        %v255 = vld [vmem:[%s237 + $0x78] sm:$0xff]
        %v256 = vld [vmem:[%s1] sm:$0xff]
        %v257 = vld [vmem:[%s1 + $0x8] sm:$0xff]
        %v258 = vld [vmem:[%s1 + $0x10] sm:$0xff]
        %v259 = vld [vmem:[%s1 + $0x18] sm:$0xff]
        %v260 = vld [vmem:[%s1 + $0x20] sm:$0xff]
        %v261 = vld [vmem:[%s1 + $0x28] sm:$0xff]
        %v262 = vld [vmem:[%s1 + $0x30] sm:$0xff]
        %v263 = vld [vmem:[%s1 + $0x38] sm:$0xff]
        %v264 = vld [vmem:[%s2] sm:$0x3]
        %v266 = vlaneseq
        %v267 = vshrl.u32 %v266, 7
        %v268 = vsub.s32 0, %v267
        %v269 = vrot.slane %v264, %v268
        %v270 = vlaneseq
        %v271 = vshrl.u32 %v270, 7
        %v272 = vsub.s32 1, %v271
        %v273 = vrot.slane %v264, %v272
        %vm276 = vcmask 261120
        %v278 = vsel %vm276, %v240, 0
        %v281 = vsel %vm276, %v241, 0
        %v284 = vsel %vm276, %v242, 0
        %v287 = vsel %vm276, %v243, 0
        %v290 = vsel %vm276, %v244, 0
        %v293 = vsel %vm276, %v245, 0
        %v296 = vsel %vm276, %v246, 0
        %v299 = vsel %vm276, %v247, 0
        %v302 = vsel %vm276, %v248, 0
        %v305 = vsel %vm276, %v249, 0
        %v308 = vsel %vm276, %v250, 0
        %v311 = vsel %vm276, %v251, 0
        %v314 = vsel %vm276, %v252, 0
        %v317 = vsel %vm276, %v253, 0
        %v320 = vsel %vm276, %v254, 0
        %v323 = vsel %vm276, %v255, 0
        %325 = vmatprep.subr.mxu0 0.0
        %326 = vmatpush1.msra.mxu0 0.0
        %327 = vmatprep.subr.mxu0 0.0
        %328 = vmatpush1.msra.mxu0 0.0
        %329 = vmatprep.subr.mxu0 0.0
        %330 = vmatpush1.msra.mxu0 0.0
        %331 = vmatprep.subr.mxu0 0.0
        %332 = vmatpush1.msra.mxu0 0.0
        %333 = vmatprep.subr.mxu0 0.0
        %334 = vmatpush1.msra.mxu0 0.0
        %335 = vmatprep.subr.mxu0 0.0
        %336 = vmatpush1.msra.mxu0 0.0
        %337 = vmatprep.subr.mxu0 0.0
        %338 = vmatpush1.msra.mxu0 0.0
        %339 = vmatprep.subr.mxu0 0.0
        %340 = vmatpush1.msra.mxu0 0.0
        %341 = vmatprep.subr.mxu0 0.0
        %342 = vmatpush1.msra.mxu0 0.0
        %343 = vmatprep.subr.mxu0 0.0
        %344 = vmatpush1.msra.mxu0 0.0
        %345 = vmatprep.subr.mxu0 0.0
        %346 = vmatpush1.msra.mxu0 0.0
        %347 = vmatprep.subr.mxu0 0.0
        %348 = vmatpush1.msra.mxu0 0.0
        %349 = vmatprep.subr.mxu0 %v263
        %350 = vmatpush1.msra.mxu0 %v262
        %351 = vmatprep.subr.mxu0 %v261
        %352 = vmatpush1.msra.mxu0 %v260
        %353 = vmatprep.subr.mxu0 %v259
        %354 = vmatpush1.msra.mxu0 %v258
        %355 = vmatprep.subr.mxu0 %v257
        %356 = vmatpush1.msra.mxu0 %v256
        %357 = vmatprep.subr.mxu0 0.0
        %358 = vmatpush2.msra.mxu0 0.0
        %359 = vmatprep.subr.mxu0 0.0
        %360 = vmatpush2.msra.mxu0 0.0
        %361 = vmatprep.subr.mxu0 0.0
        %362 = vmatpush2.msra.mxu0 0.0
        %363 = vmatprep.subr.mxu0 0.0
        %364 = vmatpush2.msra.mxu0 0.0
        %365 = vmatprep.subr.mxu0 0.0
        %366 = vmatpush2.msra.mxu0 0.0
        %367 = vmatprep.subr.mxu0 0.0
        %368 = vmatpush2.msra.mxu0 0.0
        %369 = vmatprep.subr.mxu0 0.0
        %370 = vmatpush2.msra.mxu0 0.0
        %371 = vmatprep.subr.mxu0 0.0
        %372 = vmatpush2.msra.mxu0 0.0
        %373 = vmatprep.subr.mxu0 0.0
        %374 = vmatpush2.msra.mxu0 0.0
        %375 = vmatprep.subr.mxu0 0.0
        %376 = vmatpush2.msra.mxu0 0.0
        %377 = vmatprep.subr.mxu0 0.0
        %378 = vmatpush2.msra.mxu0 0.0
        %379 = vmatprep.subr.mxu0 0.0
        %380 = vmatpush2.msra.mxu0 0.0
        %381 = vmatprep.subr.mxu0 0.0
        %382 = vmatpush2.msra.mxu0 0.0
        %383 = vmatprep.subr.mxu0 0.0
        %384 = vmatpush2.msra.mxu0 0.0
        %385 = vmatprep.subr.mxu0 0.0
        %386 = vmatpush2.msra.mxu0 0.0
        %387 = vmatprep.subr.mxu0 0.0
        %388 = vmatpush2.msra.mxu0 0.0
        %389 = vmatprep.mubr.f32.mxu0 0.0
        %390 = vmatmul.mubr.f32.gmra.mxu0 %v278
        %v391 = vpop.f32.mrf.mxu0
        %v392 = vadd.f32 %v269, %v391
        %v393 = vpop.f32.mrf.mxu0
        %v394 = vadd.f32 %v273, %v393
        %395 = vmatprep.mubr.f32.mxu0 0.0
        %396 = vmatmul.mubr.f32.gmra.mxu0 %v281
        %v397 = vpop.f32.mrf.mxu0
        %v398 = vadd.f32 %v269, %v397
        %v399 = vpop.f32.mrf.mxu0
        %v400 = vadd.f32 %v273, %v399
        %401 = vmatprep.mubr.f32.mxu0 0.0
        %402 = vmatmul.mubr.f32.gmra.mxu0 %v284
        %v403 = vpop.f32.mrf.mxu0
        %v404 = vadd.f32 %v269, %v403
        %v405 = vpop.f32.mrf.mxu0
        %v406 = vadd.f32 %v273, %v405
        %407 = vmatprep.mubr.f32.mxu0 0.0
        %408 = vmatmul.mubr.f32.gmra.mxu0 %v287
        %v409 = vpop.f32.mrf.mxu0
        %v410 = vadd.f32 %v269, %v409
        %v411 = vpop.f32.mrf.mxu0
        %v412 = vadd.f32 %v273, %v411
        %413 = vmatprep.mubr.f32.mxu0 0.0
        %414 = vmatmul.mubr.f32.gmra.mxu0 %v290
        %v415 = vpop.f32.mrf.mxu0
        %v416 = vadd.f32 %v269, %v415
        %v417 = vpop.f32.mrf.mxu0
        %v418 = vadd.f32 %v273, %v417
        %419 = vmatprep.mubr.f32.mxu0 0.0
        %420 = vmatmul.mubr.f32.gmra.mxu0 %v293
        %v421 = vpop.f32.mrf.mxu0
        %v422 = vadd.f32 %v269, %v421
        %v423 = vpop.f32.mrf.mxu0
        %v424 = vadd.f32 %v273, %v423
        %425 = vmatprep.mubr.f32.mxu0 0.0
        %426 = vmatmul.mubr.f32.gmra.mxu0 %v296
        %v427 = vpop.f32.mrf.mxu0
        %v428 = vadd.f32 %v269, %v427
        %v429 = vpop.f32.mrf.mxu0
        %v430 = vadd.f32 %v273, %v429
        %431 = vmatprep.mubr.f32.mxu0 0.0
        %432 = vmatmul.mubr.f32.gmra.mxu0 %v299
        %v433 = vpop.f32.mrf.mxu0
        %v434 = vadd.f32 %v269, %v433
        %v435 = vpop.f32.mrf.mxu0
        %v436 = vadd.f32 %v273, %v435
        %437 = vmatprep.mubr.f32.mxu0 0.0
        %438 = vmatmul.mubr.f32.gmra.mxu0 %v302
        %v439 = vpop.f32.mrf.mxu0
        %v440 = vadd.f32 %v269, %v439
        %v441 = vpop.f32.mrf.mxu0
        %v442 = vadd.f32 %v273, %v441
        %443 = vmatprep.mubr.f32.mxu0 0.0
        %444 = vmatmul.mubr.f32.gmra.mxu0 %v305
        %v445 = vpop.f32.mrf.mxu0
        %v446 = vadd.f32 %v269, %v445
        %v447 = vpop.f32.mrf.mxu0
        %v448 = vadd.f32 %v273, %v447
        %449 = vmatprep.mubr.f32.mxu0 0.0
        %450 = vmatmul.mubr.f32.gmra.mxu0 %v308
        %v451 = vpop.f32.mrf.mxu0
        %v452 = vadd.f32 %v269, %v451
        %v453 = vpop.f32.mrf.mxu0
        %v454 = vadd.f32 %v273, %v453
        %455 = vmatprep.mubr.f32.mxu0 0.0
        %456 = vmatmul.mubr.f32.gmra.mxu0 %v311
        %v457 = vpop.f32.mrf.mxu0
        %v458 = vadd.f32 %v269, %v457
        %v459 = vpop.f32.mrf.mxu0
        %v460 = vadd.f32 %v273, %v459
        %461 = vmatprep.mubr.f32.mxu0 0.0
        %462 = vmatmul.mubr.f32.gmra.mxu0 %v314
        %v463 = vpop.f32.mrf.mxu0
        %v464 = vadd.f32 %v269, %v463
        %v465 = vpop.f32.mrf.mxu0
        %v466 = vadd.f32 %v273, %v465
        %467 = vmatprep.mubr.f32.mxu0 0.0
        %468 = vmatmul.mubr.f32.gmra.mxu0 %v317
        %v469 = vpop.f32.mrf.mxu0
        %v470 = vadd.f32 %v269, %v469
        %v471 = vpop.f32.mrf.mxu0
        %v472 = vadd.f32 %v273, %v471
        %473 = vmatprep.mubr.f32.mxu0 0.0
        %474 = vmatmul.mubr.f32.gmra.mxu0 %v320
        %v475 = vpop.f32.mrf.mxu0
        %v476 = vadd.f32 %v269, %v475
        %v477 = vpop.f32.mrf.mxu0
        %v478 = vadd.f32 %v273, %v477
        %479 = vmatprep.mubr.f32.mxu0 0.0
        %480 = vmatmul.mubr.f32.gmra.mxu0 %v323
        %v481 = vpop.f32.mrf.mxu0
        %v482 = vadd.f32 %v269, %v481
        %v483 = vpop.f32.mrf.mxu0
        %v484 = vadd.f32 %v273, %v483
        %485 = vdwg.mxu0
        %v486 = vmax.f32 %v392, 0.0
        %v487 = vmax.f32 %v394, 0.0
        %v488 = vmax.f32 %v398, 0.0
        %v489 = vmax.f32 %v400, 0.0
        %v490 = vmax.f32 %v404, 0.0
        %v491 = vmax.f32 %v406, 0.0
        %v492 = vmax.f32 %v410, 0.0
        %v493 = vmax.f32 %v412, 0.0
        %v494 = vmax.f32 %v416, 0.0
        %v495 = vmax.f32 %v418, 0.0
        %v496 = vmax.f32 %v422, 0.0
        %v497 = vmax.f32 %v424, 0.0
        %v498 = vmax.f32 %v428, 0.0
        %v499 = vmax.f32 %v430, 0.0
        %v500 = vmax.f32 %v434, 0.0
        %v501 = vmax.f32 %v436, 0.0
        %v502 = vmax.f32 %v440, 0.0
        %v503 = vmax.f32 %v442, 0.0
        %v504 = vmax.f32 %v446, 0.0
        %v505 = vmax.f32 %v448, 0.0
        %v506 = vmax.f32 %v452, 0.0
        %v507 = vmax.f32 %v454, 0.0
        %v508 = vmax.f32 %v458, 0.0
        %v509 = vmax.f32 %v460, 0.0
        %v510 = vmax.f32 %v464, 0.0
        %v511 = vmax.f32 %v466, 0.0
        %v512 = vmax.f32 %v470, 0.0
        %v513 = vmax.f32 %v472, 0.0
        %v514 = vmax.f32 %v476, 0.0
        %v515 = vmax.f32 %v478, 0.0
        %v516 = vmax.f32 %v482, 0.0
        %v517 = vmax.f32 %v484, 0.0
        %518 = vst [vmem:[%s221] sm:$0xff] %v486
        %519 = vst [vmem:[%s221 + $0x8] sm:$0xff] %v487
        %520 = vst [vmem:[%s221 + $0x10] sm:$0xff] %v488
        %521 = vst [vmem:[%s221 + $0x18] sm:$0xff] %v489
        %522 = vst [vmem:[%s221 + $0x20] sm:$0xff] %v490
        %523 = vst [vmem:[%s221 + $0x28] sm:$0xff] %v491
        %524 = vst [vmem:[%s221 + $0x30] sm:$0xff] %v492
        %525 = vst [vmem:[%s221 + $0x38] sm:$0xff] %v493
        %526 = vst [vmem:[%s221 + $0x40] sm:$0xff] %v494
        %527 = vst [vmem:[%s221 + $0x48] sm:$0xff] %v495
        %528 = vst [vmem:[%s221 + $0x50] sm:$0xff] %v496
        %529 = vst [vmem:[%s221 + $0x58] sm:$0xff] %v497
        %530 = vst [vmem:[%s221 + $0x60] sm:$0xff] %v498
        %531 = vst [vmem:[%s221 + $0x68] sm:$0xff] %v499
        %532 = vst [vmem:[%s221 + $0x70] sm:$0xff] %v500
        %533 = vst [vmem:[%s221 + $0x78] sm:$0xff] %v501
        %534 = vst [vmem:[%s221 + $0x80] sm:$0xff] %v502
        %535 = vst [vmem:[%s221 + $0x88] sm:$0xff] %v503
        %536 = vst [vmem:[%s221 + $0x90] sm:$0xff] %v504
        %537 = vst [vmem:[%s221 + $0x98] sm:$0xff] %v505
        %538 = vst [vmem:[%s221 + $0xa0] sm:$0xff] %v506
        %539 = vst [vmem:[%s221 + $0xa8] sm:$0xff] %v507
        %540 = vst [vmem:[%s221 + $0xb0] sm:$0xff] %v508
        %541 = vst [vmem:[%s221 + $0xb8] sm:$0xff] %v509
        %542 = vst [vmem:[%s221 + $0xc0] sm:$0xff] %v510
        %543 = vst [vmem:[%s221 + $0xc8] sm:$0xff] %v511
        %544 = vst [vmem:[%s221 + $0xd0] sm:$0xff] %v512
        %545 = vst [vmem:[%s221 + $0xd8] sm:$0xff] %v513
        %546 = vst [vmem:[%s221 + $0xe0] sm:$0xff] %v514
        %547 = vst [vmem:[%s221 + $0xe8] sm:$0xff] %v515
        %548 = vst [vmem:[%s221 + $0xf0] sm:$0xff] %v516
        %549 = vst [vmem:[%s221 + $0xf8] sm:$0xff] %v517
        %550 = vxpose.xlu0.b32.start [1/16] %v486, 128
        %551 = vxpose.xlu0.b32.cont [2/16] %v488, 128
        %552 = vxpose.xlu0.b32.cont [3/16] %v490, 128
        %553 = vxpose.xlu0.b32.cont [4/16] %v492, 128
        %554 = vxpose.xlu0.b32.cont [5/16] %v494, 128
        %555 = vxpose.xlu0.b32.cont [6/16] %v496, 128
        %556 = vxpose.xlu0.b32.cont [7/16] %v498, 128
        %557 = vxpose.xlu0.b32.cont [8/16] %v500, 128
        %558 = vxpose.xlu0.b32.cont [9/16] %v502, 128
        %559 = vxpose.xlu0.b32.cont [10/16] %v504, 128
        %560 = vxpose.xlu0.b32.cont [11/16] %v506, 128
        %561 = vxpose.xlu0.b32.cont [12/16] %v508, 128
        %562 = vxpose.xlu0.b32.cont [13/16] %v510, 128
        %563 = vxpose.xlu0.b32.cont [14/16] %v512, 128
        %564 = vxpose.xlu0.b32.cont [15/16] %v514, 128
        %565 = vxpose.xlu0.b32.end [16/16] %v516, 128
        %v566 = vpop.trf.xlu0
        %v567 = vpop.trf.xlu0
        %v568 = vpop.trf.xlu0
        %v569 = vpop.trf.xlu0
        %v570 = vpop.trf.xlu0
        %v571 = vpop.trf.xlu0
        %v572 = vpop.trf.xlu0
        %v573 = vpop.trf.xlu0
        %v574 = vpop.trf.xlu0
        %v575 = vpop.trf.xlu0
        %v576 = vpop.trf.xlu0
        %v577 = vpop.trf.xlu0
        %v578 = vpop.trf.xlu0
        %v579 = vpop.trf.xlu0
        %v580 = vpop.trf.xlu0
        %v581 = vpop.trf.xlu0
        %582 = vxpose.xlu0.b32.start [1/16] %v487, 128
        %583 = vxpose.xlu0.b32.cont [2/16] %v489, 128
        %584 = vxpose.xlu0.b32.cont [3/16] %v491, 128
        %585 = vxpose.xlu0.b32.cont [4/16] %v493, 128
        %586 = vxpose.xlu0.b32.cont [5/16] %v495, 128
        %587 = vxpose.xlu0.b32.cont [6/16] %v497, 128
        %588 = vxpose.xlu0.b32.cont [7/16] %v499, 128
        %589 = vxpose.xlu0.b32.cont [8/16] %v501, 128
        %590 = vxpose.xlu0.b32.cont [9/16] %v503, 128
        %591 = vxpose.xlu0.b32.cont [10/16] %v505, 128
        %592 = vxpose.xlu0.b32.cont [11/16] %v507, 128
        %593 = vxpose.xlu0.b32.cont [12/16] %v509, 128
        %594 = vxpose.xlu0.b32.cont [13/16] %v511, 128
        %595 = vxpose.xlu0.b32.cont [14/16] %v513, 128
        %596 = vxpose.xlu0.b32.cont [15/16] %v515, 128
        %597 = vxpose.xlu0.b32.end [16/16] %v517, 128
        %v598 = vpop.trf.xlu0
        %v599 = vpop.trf.xlu0
        %v600 = vpop.trf.xlu0
        %v601 = vpop.trf.xlu0
        %v602 = vpop.trf.xlu0
        %v603 = vpop.trf.xlu0
        %v604 = vpop.trf.xlu0
        %v605 = vpop.trf.xlu0
        %v606 = vpop.trf.xlu0
        %v607 = vpop.trf.xlu0
        %v608 = vpop.trf.xlu0
        %v609 = vpop.trf.xlu0
        %v610 = vpop.trf.xlu0
        %v611 = vpop.trf.xlu0
        %v612 = vpop.trf.xlu0
        %v613 = vpop.trf.xlu0
        %614 = vst [vmem:[%s228] sm:$0xff] %v566
        %615 = vst [vmem:[%s228 + $0x8] sm:$0xff] %v567
        %616 = vst [vmem:[%s228 + $0x10] sm:$0xff] %v568
        %617 = vst [vmem:[%s228 + $0x18] sm:$0xff] %v569
        %618 = vst [vmem:[%s228 + $0x20] sm:$0xff] %v570
        %619 = vst [vmem:[%s228 + $0x28] sm:$0xff] %v571
        %620 = vst [vmem:[%s228 + $0x30] sm:$0xff] %v572
        %621 = vst [vmem:[%s228 + $0x38] sm:$0xff] %v573
        %622 = vst [vmem:[%s228 + $0x40] sm:$0xff] %v574
        %623 = vst [vmem:[%s228 + $0x48] sm:$0xff] %v575
        %624 = vst [vmem:[%s228 + $0x50] sm:$0xff] %v576
        %625 = vst [vmem:[%s228 + $0x58] sm:$0xff] %v577
        %626 = vst [vmem:[%s228 + $0x60] sm:$0xff] %v578
        %627 = vst [vmem:[%s228 + $0x68] sm:$0xff] %v579
        %628 = vst [vmem:[%s228 + $0x70] sm:$0xff] %v580
        %629 = vst [vmem:[%s228 + $0x78] sm:$0xff] %v581
        %630 = vst [vmem:[%s228 + $0x80] sm:$0xff] %v598
        %631 = vst [vmem:[%s228 + $0x88] sm:$0xff] %v599
        %632 = vst [vmem:[%s228 + $0x90] sm:$0xff] %v600
        %633 = vst [vmem:[%s228 + $0x98] sm:$0xff] %v601
        %634 = vst [vmem:[%s228 + $0xa0] sm:$0xff] %v602
        %635 = vst [vmem:[%s228 + $0xa8] sm:$0xff] %v603
        %636 = vst [vmem:[%s228 + $0xb0] sm:$0xff] %v604
        %637 = vst [vmem:[%s228 + $0xb8] sm:$0xff] %v605
        %638 = vst [vmem:[%s228 + $0xc0] sm:$0xff] %v606
        %639 = vst [vmem:[%s228 + $0xc8] sm:$0xff] %v607
        %640 = vst [vmem:[%s228 + $0xd0] sm:$0xff] %v608
        %641 = vst [vmem:[%s228 + $0xd8] sm:$0xff] %v609
        %642 = vst [vmem:[%s228 + $0xe0] sm:$0xff] %v610
        %643 = vst [vmem:[%s228 + $0xe8] sm:$0xff] %v611
        %644 = vst [vmem:[%s228 + $0xf0] sm:$0xff] %v612
        %645 = vst [vmem:[%s228 + $0xf8] sm:$0xff] %v613
        %s646 = sand.u32 %s114, 1
        %s647 = scalar_lea.sflag [#allocation3], %s646
        %s648 = sand.u32 %s114, 1
        %s649 = smul.addr %s648, 256
        %s650 = scalar_lea.vmem [#allocation2], %s649
        %s651 = sand.u32 %s142, 1
        %s652 = scalar_lea.sflag [#allocation5], %s651
        %s653 = sand.u32 %s142, 1
        %s654 = smul.addr %s653, 256
        %s655 = scalar_lea.vmem [#allocation4], %s654
        // Predicated region
        $region33: #{tpu_custom_call.1} parent=31 // pred_check
          %p656 = pneg %p124
        $region34: #{tpu_custom_call.1} parent=31 // pred_check_branch
          %658 = sbr.rel (%p656) target = $region36
        $region35: #{tpu_custom_call.1} parent=31 // pred_region
          %s659 = smul.u32 16, %s27
          %s661 = ssub.s32 4096, 4096
          %662 = vsyncadd %s647, %s661
          %s663 = smul.addr %s659, 2
          %s664 = smul.addr %s26, 32
          %s665 = sadd.s32 %s663, %s664
          %s666 = smul.addr %s665, 128
          %s667 = scalar_lea.hbm %s3, %s666
          %s668 = sshll.u32 %s650, 4
          %s669 = int_to_ptr.vmem [resolvable:$true] %s668
          %674 = dma.vmem_to_hbm [thread:$0]  %s669, 4096, %s667, %s647, 256, 256, 16
        $region36: #{tpu_custom_call.1} parent=31 // pred_fallthru
          _
        // Predicated region
        $region37: #{tpu_custom_call.1} parent=31 // pred_check
          %p675 = pneg %p152
        $region38: #{tpu_custom_call.1} parent=31 // pred_check_branch
          %677 = sbr.rel (%p675) target = $region40
        $region39: #{tpu_custom_call.1} parent=31 // pred_region
          %s679 = ssub.s32 4096, 4096
          %680 = vsyncadd %s652, %s679
          %s681 = smul.addr %s26, 32
          %s682 = sadd.s32 %s27, %s681
          %s683 = smul.addr %s682, 128
          %s684 = scalar_lea.hbm %s4, %s683
          %s685 = sshll.u32 %s655, 4
          %s686 = int_to_ptr.vmem [resolvable:$true] %s685
          %691 = dma.vmem_to_hbm [thread:$0]  %s686, 4096, %s684, %s652, 128, 128, 8
        $region40: #{tpu_custom_call.1} parent=31 // pred_fallthru
          _
      $region32: #{tpu_custom_call.1} parent=5 // pred_fallthru
        _
      %p692 = scmp.le.s32.totalorder 2, %s17
      // Predicated region
      $region41: #{tpu_custom_call.1} parent=5 // pred_check
        %p693 = pneg %p692
      $region42: #{tpu_custom_call.1} parent=5 // pred_check_branch
        %695 = sbr.rel (%p693) target = $region44
      $region43: #{tpu_custom_call.1} parent=5 // pred_region
        %s696 = ssub.s32 %s17, 2
        // Predicated region
        $region45: #{tpu_custom_call.1} parent=43 // pred_check
          %p697 = pneg %p130
        $region46: #{tpu_custom_call.1} parent=43 // pred_check_branch
          %699 = sbr.rel (%p697) target = $region48
        $region47: #{tpu_custom_call.1} parent=43 // pred_region
          %s700 = sand.u32 %s115, 1
          %s701 = scalar_lea.sflag [#allocation3], %s700
          %s702 = sand.u32 %s115, 1
          %s703 = smul.addr %s702, 256
          %s704 = scalar_lea.vmem [#allocation2], %s703
          %705 = dma.done %s701, 4096
        $region48: #{tpu_custom_call.1} parent=43 // pred_fallthru
          _
        // Predicated region
        $region49: #{tpu_custom_call.1} parent=43 // pred_check
          %p706 = pneg %p158
        $region50: #{tpu_custom_call.1} parent=43 // pred_check_branch
          %708 = sbr.rel (%p706) target = $region52
        $region51: #{tpu_custom_call.1} parent=43 // pred_region
          %s709 = sand.u32 %s143, 1
          %s710 = scalar_lea.sflag [#allocation5], %s709
          %s711 = sand.u32 %s143, 1
          %s712 = smul.addr %s711, 256
          %s713 = scalar_lea.vmem [#allocation4], %s712
          %714 = dma.done %s710, 4096
        $region52: #{tpu_custom_call.1} parent=43 // pred_fallthru
          _
      $region44: #{tpu_custom_call.1} parent=5 // pred_fallthru
        _
    $region6: #{tpu_custom_call.1} parent=1 // loop_footer
      %s21 = sadd.s32 1, %s17
    $region7: #{tpu_custom_call.1} parent=1 // loop_footer_branch
      %16 = sbr.rel target = $region3
    $region8: #{tpu_custom_call.1} parent=1 // loop_exit
      _
    %715 = vsyncpa [#allocation3], 1
    %s716 = scalar_lea.sflag [#allocation3], 1
    %717 = vsyncpa %s716, 1
    %718 = vsyncpa [#allocation5], 1
    %s719 = scalar_lea.sflag [#allocation5], 1
    %720 = vsyncpa %s719, 1

</llo_original>
